<compile_context>
chip_gen: v7x
topology: tpu7x:2x2x1
jax: 0.10.0
libtpu: 0.0.40
codegen_flags: <defaults>
</compile_context>

<pallas_src>
import functools
import math

import jax
import jax.numpy as jnp
from jax import lax
from jax.experimental import pallas as pl
from jax.experimental.pallas import tpu as pltpu


# ---------------------------------------------------------------------------
# Kernel: fused 2x2 patch-merge gather + LayerNorm(4C) + bias-free Linear 4C->2C
# ---------------------------------------------------------------------------
def _merge_ln_matmul_kernel(x_ref, w0_ref, w1_ref, b_ref, o_ref, *, eps, k_full):
    # x_ref : (rt, 2, Wo, 2C) block of the (B, Ho, 2, Wo, 2C) view of x.
    #         axis 1 = row parity; last dim = [col-even C | col-odd C].
    # w0_ref: (2C, N) f32 gamma-folded reduction rows for row parity 0 ([x0|x2])
    # w1_ref: (2C, N) f32 gamma-folded reduction rows for row parity 1 ([x1|x3])
    # b_ref : (1, N)  f32  beta @ W
    # o_ref : (rt*Wo, N)   N-wide output block (no padded HBM writes)
    xb = x_ref[...]
    c0 = xb[:, 0, :, :].astype(jnp.float32)      # (rt, Wo, 2C) = [x0 | x2]
    c1 = xb[:, 1, :, :].astype(jnp.float32)      # (rt, Wo, 2C) = [x1 | x3]

    # One-pass LayerNorm statistics over the full 4C channel group (f32).
    inv_k = 1.0 / k_full
    s = jnp.sum(c0, -1, keepdims=True) + jnp.sum(c1, -1, keepdims=True)
    ss = jnp.sum(c0 * c0, -1, keepdims=True) + jnp.sum(c1 * c1, -1, keepdims=True)
    mean = s * inv_k
    var = jnp.maximum(ss * inv_k - mean * mean, 0.0)
    inv = lax.rsqrt(var + eps)

    # Normalized chunks; f32 operands to the MXU (memory-bound kernel -> free).
    h0 = (c0 - mean) * inv
    h1 = (c1 - mean) * inv
    rt, wo, twoc = h0.shape
    # f32 sublane tile is 8: this collapse is a free re-view whenever Wo % 8 == 0
    # (true for the test shape and any Wo multiple of 8).
    # TODO(synk): a 3-D 'rwc,cn->rwn' dot is not reliably lowered by Mosaic, so
    # keep the 2-D form; for Wo not a multiple of 8 Mosaic inserts a relayout.
    h0 = h0.reshape(rt * wo, twoc)
    h1 = h1.reshape(rt * wo, twoc)

    acc = jnp.dot(h0, w0_ref[...], preferred_element_type=jnp.float32)
    acc = acc + jnp.dot(h1, w1_ref[...], preferred_element_type=jnp.float32)
    acc = acc + b_ref[...]
    o_ref[...] = acc.astype(o_ref.dtype)


# ---------------------------------------------------------------------------
# Parameter preprocessing (run once at init time; hoisted out of the forward)
# ---------------------------------------------------------------------------
def prepare_patch_merging_params(gamma, beta, weight):
    """Fold the LayerNorm affine into the reduction weight / bias.

    Torch merged-channel order is [x0 | x1 | x2 | x3]
    (x0: r even/c even, x1: r odd/c even, x2: r even/c odd, x3: r odd/c odd).
    In-kernel memory order is rp=0 -> [x0 | x2], rp=1 -> [x1 | x3].
    """
    K = gamma.shape[0]
    C = K // 4
    g = gamma.astype(jnp.float32)
    wf = weight.astype(jnp.float32)
    gw = g[:, None] * wf                                               # (4C, N)
    w0 = jnp.concatenate([gw[0 * C:1 * C], gw[2 * C:3 * C]], axis=0)   # rp=0 rows
    w1 = jnp.concatenate([gw[1 * C:2 * C], gw[3 * C:4 * C]], axis=0)   # rp=1 rows
    bias = (beta.astype(jnp.float32) @ wf)[None, :]                    # (1, N)
    return w0, w1, bias


# ---------------------------------------------------------------------------
# Tiling helpers (tile-padding-aware VMEM accounting)
# ---------------------------------------------------------------------------
def _round_up(v, m):
    return -(-v // m) * m


def _padded_bytes(shape, itemsize):
    """VMEM bytes for a block, including (sublane, 128-lane) tile padding."""
    sub = max(8, 8 * (4 // max(itemsize, 1)))     # 8 for f32, 16 for bf16, ...
    dims = list(shape)
    dims[-1] = _round_up(dims[-1], 128)
    if len(dims) >= 2:
        dims[-2] = _round_up(dims[-2], sub)
    return math.prod(dims) * itemsize


# ---------------------------------------------------------------------------
# Forward
# ---------------------------------------------------------------------------
def patch_merging_apply(x, w0, w1, bias, input_resolution, *, eps=1e-5):
    """PatchMerging forward with pre-folded parameters.

    Args:
      x:    (B, H*W, C)
      w0:   (2C, 2C) f32  gamma-folded weight rows for row-parity 0
      w1:   (2C, 2C) f32  gamma-folded weight rows for row-parity 1
      bias: (1, 2C)  f32  beta @ W
    Returns:
      (B, (H//2)*(W//2), 2C)
    """
    H, W = input_resolution
    B, L, C = x.shape
    assert L == H * W, "input feature has wrong size"
    assert H % 2 == 0 and W % 2 == 0, f"x size ({H}*{W}) are not even."
    Ho, Wo = H // 2, W // 2
    K = 4 * C
    N = 2 * C
    T = Ho * Wo
    itemsize = x.dtype.itemsize

    w0 = w0.astype(jnp.float32)
    w1 = w1.astype(jnp.float32)
    bias = bias.astype(jnp.float32)

    # Free view: (B, Ho, row-parity, Wo, 2C); no HBM copy.
    xr = x.reshape(B, Ho, 2, Wo, 2 * C)

    # ---- per-generation VMEM budget ----------------------------------------
    try:
        info = pltpu.get_tpu_info()
        vmem_cap = int(getattr(info, "vmem_capacity_bytes", 64 * 1024 * 1024))
    except Exception:
        vmem_cap = 64 * 1024 * 1024
    vmem_budget = min(48 * 1024 * 1024, int(0.60 * vmem_cap))   # ~38 MiB v7x, 48 MiB v5e/v6e
    vmem_ceiling = int(0.75 * vmem_cap)                         # ~48 MiB v7x, 96 MiB v5e/v6e

    def vmem_need(r):
        x_blk = _padded_bytes((r, 2, Wo, 2 * C), itemsize)       # input block
        o_blk = _padded_bytes((r * Wo, N), itemsize)             # output block
        w_res = 2 * _padded_bytes((2 * C, N), 4) + _padded_bytes((1, N), 4)
        interm = 2 * _padded_bytes((r, Wo, 2 * C), 4) + _padded_bytes((r * Wo, N), 4)
        return 2 * (x_blk + o_blk) + 2 * w_res + interm          # double-buffered I/O

    # ---- rt selection over the H/2 axis -------------------------------------
    # Output block rows rt*Wo must be a multiple of 8 (or full extent).
    cands = [r for r in range(1, Ho + 1) if r == Ho or (r * Wo) % 8 == 0]
    fit = [r for r in cands if vmem_need(r) <= vmem_budget] or [min(cands)]
    target_rows = 2048
    under = [r for r in fit if r * Wo <= target_rows]
    rt = max(under) if under else min(fit)

    def steps(r):
        return B * pl.cdiv(Ho, r)

    # Keep both v7x TensorCores busy: prefer an even step count (>= 2) without
    # shrinking the block by more than 2x.
    if steps(rt) < 2 or steps(rt) % 2 != 0:
        better = [r for r in fit
                  if steps(r) >= 2 and steps(r) % 2 == 0 and 2 * r >= rt]
        if better:
            rt = max(better)

    grid = (B, pl.cdiv(Ho, rt))
    vmem_limit = int(min(vmem_ceiling,
                         max(int(1.3 * vmem_need(rt)), 32 * 1024 * 1024)))

    cost = pl.CostEstimate(
        flops=int(2 * B * T * K * N),
        transcendentals=int(B * T),
        bytes_accessed=int(x.size * itemsize + B * T * N * itemsize
                           + (w0.size + w1.size + bias.size) * 4),
    )

    out = pl.pallas_call(
        functools.partial(_merge_ln_matmul_kernel, eps=eps, k_full=float(K)),
        out_shape=jax.ShapeDtypeStruct((B, T, N), x.dtype),
        grid_spec=pltpu.PrefetchScalarGridSpec(
            num_scalar_prefetch=0,
            grid=grid,
            in_specs=[
                pl.BlockSpec((None, rt, 2, Wo, 2 * C), lambda b, i: (b, i, 0, 0, 0)),
                pl.BlockSpec((2 * C, N), lambda b, i: (0, 0)),   # w0 (resident)
                pl.BlockSpec((2 * C, N), lambda b, i: (0, 0)),   # w1 (resident)
                pl.BlockSpec((1, N), lambda b, i: (0, 0)),       # bias
            ],
            out_specs=pl.BlockSpec((None, rt * Wo, N), lambda b, i: (b, i, 0)),
        ),
        compiler_params=pltpu.CompilerParams(
            dimension_semantics=("parallel", "parallel"),
            vmem_limit_bytes=vmem_limit,
        ),
        cost_estimate=cost,
    )(xr, w0, w1, bias)
    return out


def patch_merging_forward(x, gamma, beta, weight, input_resolution, *, eps=1e-5):
    """Convenience wrapper: fold params then apply (prefer caching the fold)."""
    w0, w1, bias = prepare_patch_merging_params(gamma, beta, weight)
    return patch_merging_apply(x, w0, w1, bias, input_resolution, eps=eps)


# ---------------------------------------------------------------------------
# Pure-JAX f32 reference mirroring the PyTorch module
# ---------------------------------------------------------------------------
def _reference_forward(x, gamma, beta, weight, input_resolution, eps=1e-5):
    H, W = input_resolution
    B, L, C = x.shape
    xv = x.reshape(B, H, W, C)
    x0 = xv[:, 0::2, 0::2, :]
    x1 = xv[:, 1::2, 0::2, :]
    x2 = xv[:, 0::2, 1::2, :]
    x3 = xv[:, 1::2, 1::2, :]
    m = jnp.concatenate([x0, x1, x2, x3], axis=-1).reshape(B, -1, 4 * C)
    m = m.astype(jnp.float32)
    mean = jnp.mean(m, axis=-1, keepdims=True)
    var = jnp.mean((m - mean) ** 2, axis=-1, keepdims=True)
    y = (m - mean) * jax.lax.rsqrt(var + eps) * gamma + beta
    return jnp.einsum("blk,kn->bln", y, weight).astype(x.dtype)


if __name__ == "__main__":
    # Config: input_resolution=(16, 16), dim=32  -> 4C=128, 2C=64
    H, W = 16, 16
    dim = 32
    B = 2

    key = jax.random.PRNGKey(0)
    kx, kg, kb, kw = jax.random.split(key, 4)

    x = jax.random.normal(kx, (B, H * W, dim), dtype=jnp.float32)
    gamma = 1.0 + 0.02 * jax.random.normal(kg, (4 * dim,), dtype=jnp.float32)
    beta = 0.02 * jax.random.normal(kb, (4 * dim,), dtype=jnp.float32)
    weight = 0.05 * jax.random.normal(kw, (4 * dim, 2 * dim), dtype=jnp.float32)

    # Weight preprocessing hoisted out of the per-step forward (done once).
    w0, w1, bias = prepare_patch_merging_params(gamma, beta, weight)

    out = patch_merging_apply(x, w0, w1, bias, (H, W))
    out = jax.block_until_ready(out)

    ref = _reference_forward(x, gamma, beta, weight, (H, W))
    assert out.shape == (B, (H // 2) * (W // 2), 2 * dim), out.shape
    # f32 MXU operands -> error typically <= 1e-3; keep a safe tolerance.
    err = float(jnp.max(jnp.abs(out - ref)))
    assert jnp.allclose(out, ref, atol=2e-2, rtol=2e-2), err
    print("KERNEL_OK")
</pallas_src>

<mosaic_0001>
module attributes {stable_mosaic.version = 11 : i64} {
  func.func @_merge_ln_matmul_kernel(%arg0: i32, %arg1: i32, %arg2: memref<1x8x2x8x64xf32, #tpu.memory_space<vmem>>, %arg3: memref<64x64xf32, #tpu.memory_space<vmem>>, %arg4: memref<64x64xf32, #tpu.memory_space<vmem>>, %arg5: memref<1x64xf32, #tpu.memory_space<vmem>>, %arg6: memref<1x64x64xf32, #tpu.memory_space<vmem>>) attributes {dimension_semantics = [#tpu.dimension_semantics<parallel>, #tpu.dimension_semantics<parallel>], iteration_bounds = array<i64: 2, 1>, scalar_prefetch = 0 : i64, scratch_operands = 0 : i64, tpu.core_type = #tpu.core_type<tc>, window_params = [{transform_indices = @transform_0, window_bounds = array<i64: 1, 8, 2, 8, 64>}, {pipeline_mode = #tpu.pipeline_mode<synchronous>, transform_indices = @transform_1, window_bounds = array<i64: 64, 64>}, {pipeline_mode = #tpu.pipeline_mode<synchronous>, transform_indices = @transform_2, window_bounds = array<i64: 64, 64>}, {pipeline_mode = #tpu.pipeline_mode<synchronous>, transform_indices = @transform_3, window_bounds = array<i64: 1, 64>}, {transform_indices = @transform_4, window_bounds = array<i64: 1, 64, 64>}]} {
    %c0 = arith.constant 0 : index
    %c0_0 = arith.constant 0 : index
    %c0_1 = arith.constant 0 : index
    %c0_2 = arith.constant 0 : index
    %c0_3 = arith.constant 0 : index
    %0 = vector.load %arg2[%c0, %c0_0, %c0_1, %c0_2, %c0_3] : memref<1x8x2x8x64xf32, #tpu.memory_space<vmem>>, vector<1x8x2x8x64xf32>
    %1 = vector.shape_cast %0 : vector<1x8x2x8x64xf32> to vector<8x2x8x64xf32>
    %2 = vector.extract_strided_slice %1 {offsets = [0, 0, 0, 0], sizes = [8, 1, 8, 64], strides = [1, 1, 1, 1]} : vector<8x2x8x64xf32> to vector<8x1x8x64xf32>
    %3 = vector.shape_cast %2 : vector<8x1x8x64xf32> to vector<8x8x64xf32>
    %4 = vector.extract_strided_slice %1 {offsets = [0, 1, 0, 0], sizes = [8, 1, 8, 64], strides = [1, 1, 1, 1]} : vector<8x2x8x64xf32> to vector<8x1x8x64xf32>
    %5 = vector.shape_cast %4 : vector<8x1x8x64xf32> to vector<8x8x64xf32>
    %cst = arith.constant dense<0.000000e+00> : vector<8x8xf32>
    %6 = vector.multi_reduction <add>, %3, %cst [2] : vector<8x8x64xf32> to vector<8x8xf32>
    %7 = vector.shape_cast %6 : vector<8x8xf32> to vector<8x8x1xf32>
    %cst_4 = arith.constant dense<0.000000e+00> : vector<8x8xf32>
    %8 = vector.multi_reduction <add>, %5, %cst_4 [2] : vector<8x8x64xf32> to vector<8x8xf32>
    %9 = vector.shape_cast %8 : vector<8x8xf32> to vector<8x8x1xf32>
    %10 = arith.addf %7, %9 : vector<8x8x1xf32>
    %11 = arith.mulf %3, %3 : vector<8x8x64xf32>
    %cst_5 = arith.constant dense<0.000000e+00> : vector<8x8xf32>
    %12 = vector.multi_reduction <add>, %11, %cst_5 [2] : vector<8x8x64xf32> to vector<8x8xf32>
    %13 = vector.shape_cast %12 : vector<8x8xf32> to vector<8x8x1xf32>
    %14 = arith.mulf %5, %5 : vector<8x8x64xf32>
    %cst_6 = arith.constant dense<0.000000e+00> : vector<8x8xf32>
    %15 = vector.multi_reduction <add>, %14, %cst_6 [2] : vector<8x8x64xf32> to vector<8x8xf32>
    %16 = vector.shape_cast %15 : vector<8x8xf32> to vector<8x8x1xf32>
    %17 = arith.addf %13, %16 : vector<8x8x1xf32>
    %cst_7 = arith.constant 7.812500e-03 : f32
    %18 = vector.broadcast %cst_7 : f32 to vector<8x8x1xf32>
    %19 = arith.mulf %10, %18 : vector<8x8x1xf32>
    %cst_8 = arith.constant 7.812500e-03 : f32
    %20 = vector.broadcast %cst_8 : f32 to vector<8x8x1xf32>
    %21 = arith.mulf %17, %20 : vector<8x8x1xf32>
    %22 = arith.mulf %19, %19 : vector<8x8x1xf32>
    %23 = arith.subf %21, %22 : vector<8x8x1xf32>
    %cst_9 = arith.constant 0.000000e+00 : f32
    %24 = vector.broadcast %cst_9 : f32 to vector<8x8x1xf32>
    %25 = arith.maximumf %23, %24 : vector<8x8x1xf32>
    %cst_10 = arith.constant 9.99999974E-6 : f32
    %26 = vector.broadcast %cst_10 : f32 to vector<8x8x1xf32>
    %27 = arith.addf %25, %26 : vector<8x8x1xf32>
    %28 = math.rsqrt %27 : vector<8x8x1xf32>
    %29 = vector.broadcast %19 : vector<8x8x1xf32> to vector<8x8x64xf32>
    %30 = arith.subf %3, %29 : vector<8x8x64xf32>
    %31 = vector.broadcast %28 : vector<8x8x1xf32> to vector<8x8x64xf32>
    %32 = arith.mulf %30, %31 : vector<8x8x64xf32>
    %33 = vector.broadcast %19 : vector<8x8x1xf32> to vector<8x8x64xf32>
    %34 = arith.subf %5, %33 : vector<8x8x64xf32>
    %35 = vector.broadcast %28 : vector<8x8x1xf32> to vector<8x8x64xf32>
    %36 = arith.mulf %34, %35 : vector<8x8x64xf32>
    %37 = vector.shape_cast %32 : vector<8x8x64xf32> to vector<64x64xf32>
    %38 = vector.shape_cast %36 : vector<8x8x64xf32> to vector<64x64xf32>
    %c0_11 = arith.constant 0 : index
    %c0_12 = arith.constant 0 : index
    %39 = vector.load %arg3[%c0_11, %c0_12] : memref<64x64xf32, #tpu.memory_space<vmem>>, vector<64x64xf32>
    %cst_13 = arith.constant dense<0.000000e+00> : vector<64x64xf32>
    %40 = tpu.matmul %37, %39, %cst_13 {dimension_numbers = #tpu.dot_dimension_numbers<[1], [0], [0], [1], [0, 0, 1, 1], [], []>} : vector<64x64xf32>, vector<64x64xf32>, vector<64x64xf32> -> vector<64x64xf32>
    %c0_14 = arith.constant 0 : index
    %c0_15 = arith.constant 0 : index
    %41 = vector.load %arg4[%c0_14, %c0_15] : memref<64x64xf32, #tpu.memory_space<vmem>>, vector<64x64xf32>
    %cst_16 = arith.constant dense<0.000000e+00> : vector<64x64xf32>
    %42 = tpu.matmul %38, %41, %cst_16 {dimension_numbers = #tpu.dot_dimension_numbers<[1], [0], [0], [1], [0, 0, 1, 1], [], []>} : vector<64x64xf32>, vector<64x64xf32>, vector<64x64xf32> -> vector<64x64xf32>
    %43 = arith.addf %40, %42 : vector<64x64xf32>
    %c0_17 = arith.constant 0 : index
    %c0_18 = arith.constant 0 : index
    %44 = vector.load %arg5[%c0_17, %c0_18] : memref<1x64xf32, #tpu.memory_space<vmem>>, vector<1x64xf32>
    %45 = vector.broadcast %44 : vector<1x64xf32> to vector<64x64xf32>
    %46 = arith.addf %43, %45 : vector<64x64xf32>
    %c0_19 = arith.constant 0 : index
    %c0_20 = arith.constant 0 : index
    %c0_21 = arith.constant 0 : index
    %47 = vector.load %arg6[%c0_19, %c0_20, %c0_21] : memref<1x64x64xf32, #tpu.memory_space<vmem>>, vector<1x64x64xf32>
    %48 = vector.shape_cast %47 : vector<1x64x64xf32> to vector<64x64xf32>
    %49 = vector.shape_cast %46 : vector<64x64xf32> to vector<1x64x64xf32>
    tpu.vector_store %arg6[%c0_19, %c0_20, %c0_21], %49 {strides = array<i32>} : memref<1x64x64xf32, #tpu.memory_space<vmem>>, vector<1x64x64xf32>,
    return
  }
  func.func @transform_0(%arg0: i32, %arg1: i32) -> (i32, i32, i32, i32, i32) {
    %c0_i32 = arith.constant 0 : i32
    %c0_i32_0 = arith.constant 0 : i32
    %c0_i32_1 = arith.constant 0 : i32
    %c0_i32_2 = arith.constant 0 : i32
    return %arg0, %arg1, %c0_i32, %c0_i32_0, %c0_i32_1 : i32, i32, i32, i32, i32
  }
  func.func @transform_1(%arg0: i32, %arg1: i32) -> (i32, i32) {
    %c0_i32 = arith.constant 0 : i32
    %c0_i32_0 = arith.constant 0 : i32
    %c0_i32_1 = arith.constant 0 : i32
    return %c0_i32, %c0_i32_0 : i32, i32
  }
  func.func @transform_2(%arg0: i32, %arg1: i32) -> (i32, i32) {
    %c0_i32 = arith.constant 0 : i32
    %c0_i32_0 = arith.constant 0 : i32
    %c0_i32_1 = arith.constant 0 : i32
    return %c0_i32, %c0_i32_0 : i32, i32
  }
  func.func @transform_3(%arg0: i32, %arg1: i32) -> (i32, i32) {
    %c0_i32 = arith.constant 0 : i32
    %c0_i32_0 = arith.constant 0 : i32
    %c0_i32_1 = arith.constant 0 : i32
    return %c0_i32, %c0_i32_0 : i32, i32
  }
  func.func @transform_4(%arg0: i32, %arg1: i32) -> (i32, i32, i32) {
    %c0_i32 = arith.constant 0 : i32
    %c0_i32_0 = arith.constant 0 : i32
    return %arg0, %arg1, %c0_i32 : i32, i32, i32
  }
}

</mosaic_0001>

<llo_original>
// kernel: tpu_custom_call.1
$region0: #{tpu_custom_call.1}
  #allocation0 [shape = 'u32[]', space=smem, size = 0x4, offset = 0x4, fixed_abs, tag = 'smem constant byte address 0x4 - core index']
  #allocation1 [shape = 'u32[144,128]{1,0:T(1,128)}', space=vmem, size = 0x12000, scoped, tag = 'internal scratch']
  %s0 = inlined_call_operand.hbm [shape: f32[2,8,2,8,64], index: 0, kind: input, shape index: {}]
  %s1 = inlined_call_operand.hbm [shape: f32[64,64], index: 1, kind: input, shape index: {}]
  %s2 = inlined_call_operand.hbm [shape: f32[64,64], index: 2, kind: input, shape index: {}]
  %s3 = inlined_call_operand.vmem [shape: f32[1,64], index: 3, kind: input, shape index: {}]
  %s4 = inlined_call_operand.hbm [shape: f32[2,64,64], index: 4, kind: output, shape index: {}]
  %s5 = sld [smem:[#allocation0]]
  $region61: #{tpu_custom_call.1} parent=0
    _
  %s7 = ssub.s32 1, %s5
  %s8 = scalar_select 0, %s7, %s5
  $region1: #{tpu_custom_call.1} parent=0
    #allocation2 [shape = 'u8[131072]{0}', space=vmem, size = 0x20000, scoped, tag = 'input window, operand 0']
    #allocation3 [shape = 's32[2]{0}', space=sflag, size = 0x8, scoped, tag = 'scoped memory for tpu_custom_call.1']
    #allocation4 [shape = 's32[2]{0}', space=sflag, size = 0x8, scoped, tag = 'scoped memory for tpu_custom_call.1']
    #allocation5 [shape = 'u8[32768]{0}', space=vmem, size = 0x8000, scoped, tag = 'input window, operand 1, single buffered']
    #allocation6 [shape = 's32[1]{0}', space=sflag, size = 0x4, scoped, tag = 'scoped memory for tpu_custom_call.1']
    #allocation7 [shape = 'u8[32768]{0}', space=vmem, size = 0x8000, scoped, tag = 'input window, operand 2, single buffered']
    #allocation8 [shape = 'u8[65536]{0}', space=vmem, size = 0x10000, scoped, tag = 'output window, operand 0']
    %9 = vsyncpa [#allocation3], 0
    %s10 = scalar_lea.sflag [#allocation3], 1
    %11 = vsyncpa %s10, 0
    %12 = vsyncpa [#allocation6], 0
    %13 = vsyncpa [#allocation4], 0
    %s14 = scalar_lea.sflag [#allocation4], 1
    %15 = vsyncpa %s14, 0
    loop: start=0, step=1, limit=4
    $region2: #{tpu_custom_call.1} parent=1 // loop_pre_header
      _
    $region3: #{tpu_custom_call.1} parent=1 // loop_header
      %s17 = sphi 0, %s21
      %p18 = scmp.ge.s32.totalorder %s17, 4
      %s24 = sphi 0, %s36
      %s25 = sphi 0, %s32
      %s26 = sphi 0, %s24
      %s27 = sphi 0, %s25
      %s28 = sphi 0, %s26
      %s29 = sphi 0, %s27
      %s41 = sphi 0, %s43
      %s44 = sphi 0, %s41
      %s45 = sphi 0, %s44
      %s61 = sphi 0, %s45
      %s65 = sphi 0, %s65
      %s67 = sphi 0, %s65
      %s68 = sphi 0, %s67
      %s82 = sphi 0, %s68
      %s86 = sphi 0, %s86
      %s88 = sphi 0, %s86
      %s89 = sphi 0, %s88
      %s103 = sphi 0, %s89
      %s107 = sphi 0, %s107
      %s109 = sphi 0, %s107
      %s110 = sphi 0, %s109
      %s124 = sphi 0, %s110
      %s132 = sphi 0, %s134
      %s135 = sphi 0, %s132
      %s136 = sphi 0, %s135
      %s152 = sphi 0, %s136
    $region4: #{tpu_custom_call.1} parent=1 // loop_header_branch
      %20 = sbr.rel (%p18) target = $region8
    $region5: #{tpu_custom_call.1} parent=1 // loop_body
      %s22 = ssub.s32 %s17, 1
      %s23 = ssub.s32 %s17, 2
      %s30 = sadd.s32 1, %s25
      %p31 = scmp.ge.s32.totalorder %s30, 1
      %s32 = scalar_select %p31, 0, %s30
      %s33 = sadd.s32 1, %s24
      %s34 = scalar_select %p31, %s33, %s24
      %p35 = scmp.ge.s32.totalorder %s34, 2
      %s36 = scalar_select %p35, 0, %s34
      %s37 = ssub.s32 %s24, %s36
      %s38 = ssub.s32 %s25, %s32
      %s39 = sor.u32 %s37, %s38
      %p40 = scmp.eq.s32.totalorder %s39, 0
      %s42 = sadd.s32 %s41, 1
      %s43 = scalar_select %p40, %s41, %s42
      %p46 = pneg %p40
      %p47 = scmp.eq.s32.totalorder %s17, 1
      %p48 = por %p46, %p47
      %p49 = scmp.ne.s32.totalorder %s41, %s44
      %p50 = scmp.eq.s32.totalorder %s17, 0
      %p51 = por %p49, %p50
      %p52 = scmp.ne.s32.totalorder %s41, %s44
      %p53 = scmp.eq.s32.totalorder %s22, 1
      %p54 = por %p52, %p53
      %p55 = scmp.ne.s32.totalorder %s44, %s45
      %p56 = scmp.eq.s32.totalorder %s22, 0
      %p57 = por %p55, %p56
      %p58 = scmp.ne.s32.totalorder %s44, %s45
      %p59 = scmp.eq.s32.totalorder %s23, 1
      %p60 = por %p58, %p59
      %p62 = scmp.ne.s32.totalorder %s45, %s61
      %p63 = scmp.eq.s32.totalorder %s23, 0
      %p64 = por %p62, %p63
      %s66 = sadd.s32 %s65, 1
      %p69 = scmp.eq.s32.totalorder %s17, 1
      %p70 = scmp.ne.s32.totalorder %s65, %s67
      %p71 = scmp.eq.s32.totalorder %s17, 0
      %p72 = por %p70, %p71
      %p73 = scmp.ne.s32.totalorder %s65, %s67
      %p74 = scmp.eq.s32.totalorder %s22, 1
      %p75 = por %p73, %p74
      %p76 = scmp.ne.s32.totalorder %s67, %s68
      %p77 = scmp.eq.s32.totalorder %s22, 0
      %p78 = por %p76, %p77
      %p79 = scmp.ne.s32.totalorder %s67, %s68
      %p80 = scmp.eq.s32.totalorder %s23, 1
      %p81 = por %p79, %p80
      %p83 = scmp.ne.s32.totalorder %s68, %s82
      %p84 = scmp.eq.s32.totalorder %s23, 0
      %p85 = por %p83, %p84
      %s87 = sadd.s32 %s86, 1
      %p90 = scmp.eq.s32.totalorder %s17, 1
      %p91 = scmp.ne.s32.totalorder %s86, %s88
      %p92 = scmp.eq.s32.totalorder %s17, 0
      %p93 = por %p91, %p92
      %p94 = scmp.ne.s32.totalorder %s86, %s88
      %p95 = scmp.eq.s32.totalorder %s22, 1
      %p96 = por %p94, %p95
      %p97 = scmp.ne.s32.totalorder %s88, %s89
      %p98 = scmp.eq.s32.totalorder %s22, 0
      %p99 = por %p97, %p98
      %p100 = scmp.ne.s32.totalorder %s88, %s89
      %p101 = scmp.eq.s32.totalorder %s23, 1
      %p102 = por %p100, %p101
      %p104 = scmp.ne.s32.totalorder %s89, %s103
      %p105 = scmp.eq.s32.totalorder %s23, 0
      %p106 = por %p104, %p105
      %s108 = sadd.s32 %s107, 1
      %p111 = scmp.eq.s32.totalorder %s17, 1
      %p112 = scmp.ne.s32.totalorder %s107, %s109
      %p113 = scmp.eq.s32.totalorder %s17, 0
      %p114 = por %p112, %p113
      %p115 = scmp.ne.s32.totalorder %s107, %s109
      %p116 = scmp.eq.s32.totalorder %s22, 1
      %p117 = por %p115, %p116
      %p118 = scmp.ne.s32.totalorder %s109, %s110
      %p119 = scmp.eq.s32.totalorder %s22, 0
      %p120 = por %p118, %p119
      %p121 = scmp.ne.s32.totalorder %s109, %s110
      %p122 = scmp.eq.s32.totalorder %s23, 1
      %p123 = por %p121, %p122
      %p125 = scmp.ne.s32.totalorder %s110, %s124
      %p126 = scmp.eq.s32.totalorder %s23, 0
      %p127 = por %p125, %p126
      %s128 = ssub.s32 %s24, %s36
      %s129 = ssub.s32 %s25, %s32
      %s130 = sor.u32 %s128, %s129
      %p131 = scmp.eq.s32.totalorder %s130, 0
      %s133 = sadd.s32 %s132, 1
      %s134 = scalar_select %p131, %s132, %s133
      %p137 = pneg %p131
      %p138 = scmp.eq.s32.totalorder %s17, 1
      %p139 = por %p137, %p138
      %p140 = scmp.ne.s32.totalorder %s132, %s135
      %p141 = scmp.eq.s32.totalorder %s17, 0
      %p142 = por %p140, %p141
      %p143 = scmp.ne.s32.totalorder %s132, %s135
      %p144 = scmp.eq.s32.totalorder %s22, 1
      %p145 = por %p143, %p144
      %p146 = scmp.ne.s32.totalorder %s135, %s136
      %p147 = scmp.eq.s32.totalorder %s22, 0
      %p148 = por %p146, %p147
      %p149 = scmp.ne.s32.totalorder %s135, %s136
      %p150 = scmp.eq.s32.totalorder %s23, 1
      %p151 = por %p149, %p150
      %p153 = scmp.ne.s32.totalorder %s136, %s152
      %p154 = scmp.eq.s32.totalorder %s23, 0
      %p155 = por %p153, %p154
      %p156 = scmp.le.s32.totalorder 1, %s17
      %p157 = scmp.lt.s32.totalorder %s17, 3
      %p158 = pnand %p156, %p157
      %p159 = pneg %p158
      // Predicated region
      $region9: #{tpu_custom_call.1} parent=5 // pred_check
        _
      $region10: #{tpu_custom_call.1} parent=5 // pred_check_branch
        %161 = sbr.rel (%p158) target = $region12
      $region11: #{tpu_custom_call.1} parent=5 // pred_region
        %s162 = ssub.s32 %s17, 1
        // Predicated region
        $region13: #{tpu_custom_call.1} parent=11 // pred_check
          %p163 = pneg %p78
        $region14: #{tpu_custom_call.1} parent=11 // pred_check_branch
          %165 = sbr.rel (%p163) target = $region16
        $region15: #{tpu_custom_call.1} parent=11 // pred_region
          %s167 = ssub.s32 1024, 1024
          %168 = vsyncadd [#allocation6], %s167
          %s169 = sshll.u32 [#allocation5], 4
          %s170 = int_to_ptr.vmem [resolvable:$true] %s169
          %175 = dma.hbm_to_vmem [thread:$0]  %s1, 1024, %s170, [#allocation6], 128, 128, 8
        $region16: #{tpu_custom_call.1} parent=11 // pred_fallthru
          _
        // Predicated region
        $region17: #{tpu_custom_call.1} parent=11 // pred_check
          %p176 = pneg %p99
        $region18: #{tpu_custom_call.1} parent=11 // pred_check_branch
          %178 = sbr.rel (%p176) target = $region20
        $region19: #{tpu_custom_call.1} parent=11 // pred_region
          %s180 = ssub.s32 1024, 1024
          %181 = vsyncadd [#allocation6], %s180
          %s182 = sshll.u32 [#allocation7], 4
          %s183 = int_to_ptr.vmem [resolvable:$true] %s182
          %188 = dma.hbm_to_vmem [thread:$0]  %s2, 1024, %s183, [#allocation6], 128, 128, 8
        $region20: #{tpu_custom_call.1} parent=11 // pred_fallthru
          _
        // Predicated region
        $region21: #{tpu_custom_call.1} parent=11 // pred_check
          %p189 = pneg %p120
        $region22: #{tpu_custom_call.1} parent=11 // pred_check_branch
          %191 = sbr.rel (%p189) target = $region24
        $region23: #{tpu_custom_call.1} parent=11 // pred_region
          _
        $region24: #{tpu_custom_call.1} parent=11 // pred_fallthru
          _
      $region12: #{tpu_custom_call.1} parent=5 // pred_fallthru
        _
      %p192 = scmp.lt.s32.totalorder %s17, 2
      // Predicated region
      $region25: #{tpu_custom_call.1} parent=5 // pred_check
        %p193 = pneg %p192
      $region26: #{tpu_custom_call.1} parent=5 // pred_check_branch
        %195 = sbr.rel (%p193) target = $region28
      $region27: #{tpu_custom_call.1} parent=5 // pred_region
        // Predicated region
        $region29: #{tpu_custom_call.1} parent=27 // pred_check
          %p196 = pneg %p51
        $region30: #{tpu_custom_call.1} parent=27 // pred_check_branch
          %198 = sbr.rel (%p196) target = $region32
        $region31: #{tpu_custom_call.1} parent=27 // pred_region
          %s199 = sand.u32 %s41, 1
          %s200 = scalar_lea.sflag [#allocation3], %s199
          %s201 = sand.u32 %s41, 1
          %s202 = smul.addr %s201, 128
          %s203 = scalar_lea.vmem [#allocation2], %s202
          %s204 = smul.u32 8, %s25
          %s206 = ssub.s32 2048, 2048
          %207 = vsyncadd %s200, %s206
          %s208 = smul.addr %s204, 2
          %s209 = smul.addr %s24, 16
          %s210 = sadd.s32 %s208, %s209
          %s211 = smul.addr %s210, 128
          %s212 = scalar_lea.hbm %s0, %s211
          %s213 = sshll.u32 %s203, 4
          %s214 = int_to_ptr.vmem [resolvable:$true] %s213
          %219 = dma.hbm_to_vmem [thread:$0]  %s212, 2048, %s214, %s200, 128, 128, 8
        $region32: #{tpu_custom_call.1} parent=27 // pred_fallthru
          _
      $region28: #{tpu_custom_call.1} parent=5 // pred_fallthru
        _
      %p220 = scmp.le.s32.totalorder 1, %s17
      %p221 = scmp.lt.s32.totalorder %s17, 3
      %p222 = pnand %p220, %p221
      %p223 = pneg %p222
      // Predicated region
      $region33: #{tpu_custom_call.1} parent=5 // pred_check
        _
      $region34: #{tpu_custom_call.1} parent=5 // pred_check_branch
        %225 = sbr.rel (%p222) target = $region36
      $region35: #{tpu_custom_call.1} parent=5 // pred_region
        %s226 = ssub.s32 %s17, 1
        %s227 = sand.u32 %s44, 1
        %s228 = scalar_lea.sflag [#allocation3], %s227
        %s229 = sand.u32 %s44, 1
        %s230 = smul.addr %s229, 128
        %s231 = scalar_lea.vmem [#allocation2], %s230
        // Predicated region
        $region37: #{tpu_custom_call.1} parent=35 // pred_check
          %p232 = pneg %p57
        $region38: #{tpu_custom_call.1} parent=35 // pred_check_branch
          %234 = sbr.rel (%p232) target = $region40
        $region39: #{tpu_custom_call.1} parent=35 // pred_region
          %235 = dma.done %s228, 2048
        $region40: #{tpu_custom_call.1} parent=35 // pred_fallthru
          _
        // Predicated region
        $region41: #{tpu_custom_call.1} parent=35 // pred_check
          %p236 = pneg %p78
        $region42: #{tpu_custom_call.1} parent=35 // pred_check_branch
          %238 = sbr.rel (%p236) target = $region44
        $region43: #{tpu_custom_call.1} parent=35 // pred_region
          %239 = dma.done [#allocation6], 1024
        $region44: #{tpu_custom_call.1} parent=35 // pred_fallthru
          _
        // Predicated region
        $region45: #{tpu_custom_call.1} parent=35 // pred_check
          %p240 = pneg %p99
        $region46: #{tpu_custom_call.1} parent=35 // pred_check_branch
          %242 = sbr.rel (%p240) target = $region48
        $region47: #{tpu_custom_call.1} parent=35 // pred_region
          %243 = dma.done [#allocation6], 1024
        $region48: #{tpu_custom_call.1} parent=35 // pred_fallthru
          _
        %s244 = sand.u32 %s44, 1
        %s245 = scalar_lea.sflag [#allocation3], %s244
        %s246 = sand.u32 %s44, 1
        %s247 = smul.addr %s246, 128
        %s248 = scalar_lea.vmem [#allocation2], %s247
        %p249 = pneg %p57
        %p250 = pneg %p54
        %p251 = pneg %p78
        %p252 = pneg %p75
        %p253 = pneg %p99
        %p254 = pneg %p96
        %p255 = pneg %p120
        %p256 = pneg %p117
        %p257 = pneg %p148
        %p258 = pneg %p145
        %s259 = sand.u32 %s135, 1
        %s260 = scalar_lea.sflag [#allocation4], %s259
        %s261 = sand.u32 %s135, 1
        %s262 = smul.addr %s261, 64
        %s263 = scalar_lea.vmem [#allocation8], %s262
        %s264 = smul.u32 8, %s27
        %s265 = smul.u32 8, %s27
        %v266 = vld [vmem:[%s231] sm:$0xff]
        %v267 = vld [vmem:[%s231 + $0x8] sm:$0xff]
        %v268 = vld [vmem:[%s231 + $0x10] sm:$0xff]
        %v269 = vld [vmem:[%s231 + $0x18] sm:$0xff]
        %v270 = vld [vmem:[%s231 + $0x20] sm:$0xff]
        %v271 = vld [vmem:[%s231 + $0x28] sm:$0xff]
        %v272 = vld [vmem:[%s231 + $0x30] sm:$0xff]
        %v273 = vld [vmem:[%s231 + $0x38] sm:$0xff]
        %v274 = vld [vmem:[%s231 + $0x40] sm:$0xff]
        %v275 = vld [vmem:[%s231 + $0x48] sm:$0xff]
        %v276 = vld [vmem:[%s231 + $0x50] sm:$0xff]
        %v277 = vld [vmem:[%s231 + $0x58] sm:$0xff]
        %v278 = vld [vmem:[%s231 + $0x60] sm:$0xff]
        %v279 = vld [vmem:[%s231 + $0x68] sm:$0xff]
        %v280 = vld [vmem:[%s231 + $0x70] sm:$0xff]
        %v281 = vld [vmem:[%s231 + $0x78] sm:$0xff]
        %vm282 = vcmask 523264
        %v283 = vsel %vm282, %v266, 0.0
        %284 = vadd.xlane.f32.xlu0 %v283
        %v285 = vpop.xlane.xlu0 %284
        %v286 = vsel %vm282, %v268, 0.0
        %287 = vadd.xlane.f32.xlu0 %v286
        %v288 = vpop.xlane.xlu0 %287
        %v289 = vsel %vm282, %v270, 0.0
        %290 = vadd.xlane.f32.xlu0 %v289
        %v291 = vpop.xlane.xlu0 %290
        %v292 = vsel %vm282, %v272, 0.0
        %293 = vadd.xlane.f32.xlu0 %v292
        %v294 = vpop.xlane.xlu0 %293
        %v295 = vsel %vm282, %v274, 0.0
        %296 = vadd.xlane.f32.xlu0 %v295
        %v297 = vpop.xlane.xlu0 %296
        %v298 = vsel %vm282, %v276, 0.0
        %299 = vadd.xlane.f32.xlu0 %v298
        %v300 = vpop.xlane.xlu0 %299
        %v301 = vsel %vm282, %v278, 0.0
        %302 = vadd.xlane.f32.xlu0 %v301
        %v303 = vpop.xlane.xlu0 %302
        %v304 = vsel %vm282, %v280, 0.0
        %305 = vadd.xlane.f32.xlu0 %v304
        %v306 = vpop.xlane.xlu0 %305
        %v307 = vsel %vm282, %v267, 0.0
        %308 = vadd.xlane.f32.xlu0 %v307
        %v309 = vpop.xlane.xlu0 %308
        %v310 = vsel %vm282, %v269, 0.0
        %311 = vadd.xlane.f32.xlu0 %v310
        %v312 = vpop.xlane.xlu0 %311
        %v313 = vsel %vm282, %v271, 0.0
        %314 = vadd.xlane.f32.xlu0 %v313
        %v315 = vpop.xlane.xlu0 %314
        %v316 = vsel %vm282, %v273, 0.0
        %317 = vadd.xlane.f32.xlu0 %v316
        %v318 = vpop.xlane.xlu0 %317
        %v319 = vsel %vm282, %v275, 0.0
        %320 = vadd.xlane.f32.xlu0 %v319
        %v321 = vpop.xlane.xlu0 %320
        %v322 = vsel %vm282, %v277, 0.0
        %323 = vadd.xlane.f32.xlu0 %v322
        %v324 = vpop.xlane.xlu0 %323
        %v325 = vsel %vm282, %v279, 0.0
        %326 = vadd.xlane.f32.xlu0 %v325
        %v327 = vpop.xlane.xlu0 %326
        %v328 = vsel %vm282, %v281, 0.0
        %329 = vadd.xlane.f32.xlu0 %v328
        %v330 = vpop.xlane.xlu0 %329
        %v331 = vadd.f32 %v285, %v309
        %v332 = vadd.f32 %v288, %v312
        %v333 = vadd.f32 %v291, %v315
        %v334 = vadd.f32 %v294, %v318
        %v335 = vadd.f32 %v297, %v321
        %v336 = vadd.f32 %v300, %v324
        %v337 = vadd.f32 %v303, %v327
        %v338 = vadd.f32 %v306, %v330
        %v339 = vmul.f32 %v266, %v266
        %v340 = vmul.f32 %v268, %v268
        %v341 = vmul.f32 %v270, %v270
        %v342 = vmul.f32 %v272, %v272
        %v343 = vmul.f32 %v274, %v274
        %v344 = vmul.f32 %v276, %v276
        %v345 = vmul.f32 %v278, %v278
        %v346 = vmul.f32 %v280, %v280
        %v347 = vsel %vm282, %v339, 0.0
        %348 = vadd.xlane.f32.xlu0 %v347
        %v349 = vpop.xlane.xlu0 %348
        %v350 = vsel %vm282, %v340, 0.0
        %351 = vadd.xlane.f32.xlu0 %v350
        %v352 = vpop.xlane.xlu0 %351
        %v353 = vsel %vm282, %v341, 0.0
        %354 = vadd.xlane.f32.xlu0 %v353
        %v355 = vpop.xlane.xlu0 %354
        %v356 = vsel %vm282, %v342, 0.0
        %357 = vadd.xlane.f32.xlu0 %v356
        %v358 = vpop.xlane.xlu0 %357
        %v359 = vsel %vm282, %v343, 0.0
        %360 = vadd.xlane.f32.xlu0 %v359
        %v361 = vpop.xlane.xlu0 %360
        %v362 = vsel %vm282, %v344, 0.0
        %363 = vadd.xlane.f32.xlu0 %v362
        %v364 = vpop.xlane.xlu0 %363
        %v365 = vsel %vm282, %v345, 0.0
        %366 = vadd.xlane.f32.xlu0 %v365
        %v367 = vpop.xlane.xlu0 %366
        %v368 = vsel %vm282, %v346, 0.0
        %369 = vadd.xlane.f32.xlu0 %v368
        %v370 = vpop.xlane.xlu0 %369
        %v371 = vmul.f32 %v267, %v267
        %v372 = vmul.f32 %v269, %v269
        %v373 = vmul.f32 %v271, %v271
        %v374 = vmul.f32 %v273, %v273
        %v375 = vmul.f32 %v275, %v275
        %v376 = vmul.f32 %v277, %v277
        %v377 = vmul.f32 %v279, %v279
        %v378 = vmul.f32 %v281, %v281
        %v379 = vsel %vm282, %v371, 0.0
        %380 = vadd.xlane.f32.xlu0 %v379
        %v381 = vpop.xlane.xlu0 %380
        %v382 = vsel %vm282, %v372, 0.0
        %383 = vadd.xlane.f32.xlu0 %v382
        %v384 = vpop.xlane.xlu0 %383
        %v385 = vsel %vm282, %v373, 0.0
        %386 = vadd.xlane.f32.xlu0 %v385
        %v387 = vpop.xlane.xlu0 %386
        %v388 = vsel %vm282, %v374, 0.0
        %389 = vadd.xlane.f32.xlu0 %v388
        %v390 = vpop.xlane.xlu0 %389
        %v391 = vsel %vm282, %v375, 0.0
        %392 = vadd.xlane.f32.xlu0 %v391
        %v393 = vpop.xlane.xlu0 %392
        %v394 = vsel %vm282, %v376, 0.0
        %395 = vadd.xlane.f32.xlu0 %v394
        %v396 = vpop.xlane.xlu0 %395
        %v397 = vsel %vm282, %v377, 0.0
        %398 = vadd.xlane.f32.xlu0 %v397
        %v399 = vpop.xlane.xlu0 %398
        %v400 = vsel %vm282, %v378, 0.0
        %401 = vadd.xlane.f32.xlu0 %v400
        %v402 = vpop.xlane.xlu0 %401
        %v403 = vadd.f32 %v349, %v381
        %v404 = vadd.f32 %v352, %v384
        %v405 = vadd.f32 %v355, %v387
        %v406 = vadd.f32 %v358, %v390
        %v407 = vadd.f32 %v361, %v393
        %v408 = vadd.f32 %v364, %v396
        %v409 = vadd.f32 %v367, %v399
        %v410 = vadd.f32 %v370, %v402
        %v411 = vmul.f32 %v331, 0.0078125
        %v412 = vmul.f32 %v332, 0.0078125
        %v413 = vmul.f32 %v333, 0.0078125
        %v414 = vmul.f32 %v334, 0.0078125
        %v415 = vmul.f32 %v335, 0.0078125
        %v416 = vmul.f32 %v336, 0.0078125
        %v417 = vmul.f32 %v337, 0.0078125
        %v418 = vmul.f32 %v338, 0.0078125
        %v419 = vmul.f32 %v403, 0.0078125
        %v420 = vmul.f32 %v404, 0.0078125
        %v421 = vmul.f32 %v405, 0.0078125
        %v422 = vmul.f32 %v406, 0.0078125
        %v423 = vmul.f32 %v407, 0.0078125
        %v424 = vmul.f32 %v408, 0.0078125
        %v425 = vmul.f32 %v409, 0.0078125
        %v426 = vmul.f32 %v410, 0.0078125
        %v427 = vmul.f32 %v411, %v411
        %v428 = vmul.f32 %v412, %v412
        %v429 = vmul.f32 %v413, %v413
        %v430 = vmul.f32 %v414, %v414
        %v431 = vmul.f32 %v415, %v415
        %v432 = vmul.f32 %v416, %v416
        %v433 = vmul.f32 %v417, %v417
        %v434 = vmul.f32 %v418, %v418
        %v435 = vsub.f32 %v419, %v427
        %v436 = vsub.f32 %v420, %v428
        %v437 = vsub.f32 %v421, %v429
        %v438 = vsub.f32 %v422, %v430
        %v439 = vsub.f32 %v423, %v431
        %v440 = vsub.f32 %v424, %v432
        %v441 = vsub.f32 %v425, %v433
        %v442 = vsub.f32 %v426, %v434
        %v443 = vmax.f32 %v435, 0.0
        %v444 = vmax.f32 %v436, 0.0
        %v445 = vmax.f32 %v437, 0.0
        %v446 = vmax.f32 %v438, 0.0
        %v447 = vmax.f32 %v439, 0.0
        %v448 = vmax.f32 %v440, 0.0
        %v449 = vmax.f32 %v441, 0.0
        %v450 = vmax.f32 %v442, 0.0
        %v451 = vadd.f32 %v443, 1e-05
        %v452 = vadd.f32 %v444, 1e-05
        %v453 = vadd.f32 %v445, 1e-05
        %v454 = vadd.f32 %v446, 1e-05
        %v455 = vadd.f32 %v447, 1e-05
        %v456 = vadd.f32 %v448, 1e-05
        %v457 = vadd.f32 %v449, 1e-05
        %v458 = vadd.f32 %v450, 1e-05
        %v459 = vrsqrt.pop %v451
        %v460 = vrsqrt.pop %v452
        %v461 = vrsqrt.pop %v453
        %v462 = vrsqrt.pop %v454
        %v463 = vrsqrt.pop %v455
        %v464 = vrsqrt.pop %v456
        %v465 = vrsqrt.pop %v457
        %v466 = vrsqrt.pop %v458
        %v467 = vsub.f32 %v266, %v411
        %v468 = vsub.f32 %v268, %v412
        %v469 = vsub.f32 %v270, %v413
        %v470 = vsub.f32 %v272, %v414
        %v471 = vsub.f32 %v274, %v415
        %v472 = vsub.f32 %v276, %v416
        %v473 = vsub.f32 %v278, %v417
        %v474 = vsub.f32 %v280, %v418
        %v475 = vmul.f32 %v467, %v459
        %v476 = vmul.f32 %v468, %v460
        %v477 = vmul.f32 %v469, %v461
        %v478 = vmul.f32 %v470, %v462
        %v479 = vmul.f32 %v471, %v463
        %v480 = vmul.f32 %v472, %v464
        %v481 = vmul.f32 %v473, %v465
        %v482 = vmul.f32 %v474, %v466
        %v483 = vsub.f32 %v267, %v411
        %v484 = vsub.f32 %v269, %v412
        %v485 = vsub.f32 %v271, %v413
        %v486 = vsub.f32 %v273, %v414
        %v487 = vsub.f32 %v275, %v415
        %v488 = vsub.f32 %v277, %v416
        %v489 = vsub.f32 %v279, %v417
        %v490 = vsub.f32 %v281, %v418
        %v491 = vmul.f32 %v483, %v459
        %v492 = vmul.f32 %v484, %v460
        %v493 = vmul.f32 %v485, %v461
        %v494 = vmul.f32 %v486, %v462
        %v495 = vmul.f32 %v487, %v463
        %v496 = vmul.f32 %v488, %v464
        %v497 = vmul.f32 %v489, %v465
        %v498 = vmul.f32 %v490, %v466
        %v499 = vld [vmem:[#allocation5] sm:$0xff]
        %v500 = vld [vmem:[#allocation5 + $0x8] sm:$0xff]
        %v501 = vld [vmem:[#allocation5 + $0x10] sm:$0xff]
        %v502 = vld [vmem:[#allocation5 + $0x18] sm:$0xff]
        %v503 = vld [vmem:[#allocation5 + $0x20] sm:$0xff]
        %v504 = vld [vmem:[#allocation5 + $0x28] sm:$0xff]
        %v505 = vld [vmem:[#allocation5 + $0x30] sm:$0xff]
        %v506 = vld [vmem:[#allocation5 + $0x38] sm:$0xff]
        %v507 = vld [vmem:[#allocation7] sm:$0xff]
        %v508 = vld [vmem:[#allocation7 + $0x8] sm:$0xff]
        %v509 = vld [vmem:[#allocation7 + $0x10] sm:$0xff]
        %v510 = vld [vmem:[#allocation7 + $0x18] sm:$0xff]
        %v511 = vld [vmem:[#allocation7 + $0x20] sm:$0xff]
        %v512 = vld [vmem:[#allocation7 + $0x28] sm:$0xff]
        %v513 = vld [vmem:[#allocation7 + $0x30] sm:$0xff]
        %v514 = vld [vmem:[#allocation7 + $0x38] sm:$0xff]
        %v516 = vsel %vm282, %v491, 0
        %v519 = vsel %vm282, %v492, 0
        %v522 = vsel %vm282, %v493, 0
        %v525 = vsel %vm282, %v494, 0
        %v528 = vsel %vm282, %v495, 0
        %v531 = vsel %vm282, %v496, 0
        %v534 = vsel %vm282, %v497, 0
        %v537 = vsel %vm282, %v498, 0
        %539 = vmatprep.subr.mxu0 0.0
        %540 = vmatpush1.msra.mxu0 %v507
        %541 = vmatprep.subr.mxu0 0.0
        %542 = vmatpush1.msra.mxu0 %v508
        %543 = vmatprep.subr.mxu0 0.0
        %544 = vmatpush1.msra.mxu0 %v509
        %545 = vmatprep.subr.mxu0 0.0
        %546 = vmatpush1.msra.mxu0 %v510
        %547 = vmatprep.subr.mxu0 0.0
        %548 = vmatpush1.msra.mxu0 %v511
        %549 = vmatprep.subr.mxu0 0.0
        %550 = vmatpush1.msra.mxu0 %v512
        %551 = vmatprep.subr.mxu0 0.0
        %552 = vmatpush1.msra.mxu0 %v513
        %553 = vmatprep.subr.mxu0 0.0
        %554 = vmatpush1.msra.mxu0 %v514
        %555 = vmatprep.subr.mxu0 0.0
        %556 = vmatpush1.msra.mxu0 0.0
        %557 = vmatprep.subr.mxu0 0.0
        %558 = vmatpush1.msra.mxu0 0.0
        %559 = vmatprep.subr.mxu0 0.0
        %560 = vmatpush1.msra.mxu0 0.0
        %561 = vmatprep.subr.mxu0 0.0
        %562 = vmatpush1.msra.mxu0 0.0
        %563 = vmatprep.subr.mxu0 0.0
        %564 = vmatpush1.msra.mxu0 0.0
        %565 = vmatprep.subr.mxu0 0.0
        %566 = vmatpush1.msra.mxu0 0.0
        %567 = vmatprep.subr.mxu0 0.0
        %568 = vmatpush1.msra.mxu0 0.0
        %569 = vmatprep.subr.mxu0 0.0
        %570 = vmatpush1.msra.mxu0 0.0
        %571 = vmatprep.subr.mxu0 0.0
        %572 = vmatpush1.msra.mxu0 0.0
        %573 = vmatprep.subr.mxu0 0.0
        %574 = vmatpush1.msra.mxu0 0.0
        %575 = vmatprep.subr.mxu0 0.0
        %576 = vmatpush1.msra.mxu0 0.0
        %577 = vmatprep.subr.mxu0 0.0
        %578 = vmatpush1.msra.mxu0 0.0
        %579 = vmatprep.subr.mxu0 0.0
        %580 = vmatpush1.msra.mxu0 0.0
        %581 = vmatprep.subr.mxu0 0.0
        %582 = vmatpush1.msra.mxu0 0.0
        %583 = vmatprep.subr.mxu0 0.0
        %584 = vmatpush1.msra.mxu0 0.0
        %585 = vmatprep.subr.mxu0 0.0
        %586 = vmatpush1.msra.mxu0 0.0
        %587 = vmatprep.subr.mxu0 0.0
        %588 = vmatpush1.msra.mxu0 0.0
        %589 = vmatprep.subr.mxu0 0.0
        %590 = vmatpush1.msra.mxu0 0.0
        %591 = vmatprep.subr.mxu0 0.0
        %592 = vmatpush1.msra.mxu0 0.0
        %593 = vmatprep.subr.mxu0 0.0
        %594 = vmatpush1.msra.mxu0 0.0
        %595 = vmatprep.subr.mxu0 0.0
        %596 = vmatpush1.msra.mxu0 0.0
        %597 = vmatprep.subr.mxu0 0.0
        %598 = vmatpush1.msra.mxu0 0.0
        %599 = vmatprep.subr.mxu0 0.0
        %600 = vmatpush1.msra.mxu0 0.0
        %601 = vmatprep.subr.mxu0 0.0
        %602 = vmatpush1.msra.mxu0 0.0
        %603 = vmatprep.mubr.f32.mxu0 0.0
        %604 = vmatmul.mubr.f32.gmra.mrb[0].mxu0 %v516
        %v605 = vpop.f32.mrb[0].mxu0
        %v606 = vadd.f32 0.0, %v605
        %v607 = vpop.f32.mrb[0].mxu0
        %608 = vmatprep.mubr.f32.mxu0 0.0
        %609 = vmatmul.mubr.f32.gmra.mrb[0].mxu0 %v519
        %v610 = vpop.f32.mrb[0].mxu0
        %v611 = vadd.f32 0.0, %v610
        %v612 = vpop.f32.mrb[0].mxu0
        %613 = vmatprep.mubr.f32.mxu0 0.0
        %614 = vmatmul.mubr.f32.gmra.mrb[0].mxu0 %v522
        %v615 = vpop.f32.mrb[0].mxu0
        %v616 = vadd.f32 0.0, %v615
        %v617 = vpop.f32.mrb[0].mxu0
        %618 = vmatprep.mubr.f32.mxu0 0.0
        %619 = vmatmul.mubr.f32.gmra.mrb[0].mxu0 %v525
        %v620 = vpop.f32.mrb[0].mxu0
        %v621 = vadd.f32 0.0, %v620
        %v622 = vpop.f32.mrb[0].mxu0
        %623 = vmatprep.mubr.f32.mxu0 0.0
        %624 = vmatmul.mubr.f32.gmra.mrb[0].mxu0 %v528
        %v625 = vpop.f32.mrb[0].mxu0
        %v626 = vadd.f32 0.0, %v625
        %v627 = vpop.f32.mrb[0].mxu0
        %628 = vmatprep.mubr.f32.mxu0 0.0
        %629 = vmatmul.mubr.f32.gmra.mrb[0].mxu0 %v531
        %v630 = vpop.f32.mrb[0].mxu0
        %v631 = vadd.f32 0.0, %v630
        %v632 = vpop.f32.mrb[0].mxu0
        %633 = vmatprep.mubr.f32.mxu0 0.0
        %634 = vmatmul.mubr.f32.gmra.mrb[0].mxu0 %v534
        %v635 = vpop.f32.mrb[0].mxu0
        %v636 = vadd.f32 0.0, %v635
        %v637 = vpop.f32.mrb[0].mxu0
        %638 = vmatprep.mubr.f32.mxu0 0.0
        %639 = vmatmul.mubr.f32.gmra.mrb[0].mxu0 %v537
        %v640 = vpop.f32.mrb[0].mxu0
        %v641 = vadd.f32 0.0, %v640
        %v642 = vpop.f32.mrb[0].mxu0
        %643 = vdwg.mxu0
        %v645 = vsel %vm282, %v475, 0
        %v648 = vsel %vm282, %v476, 0
        %v651 = vsel %vm282, %v477, 0
        %v654 = vsel %vm282, %v478, 0
        %v657 = vsel %vm282, %v479, 0
        %v660 = vsel %vm282, %v480, 0
        %v663 = vsel %vm282, %v481, 0
        %v666 = vsel %vm282, %v482, 0
        %668 = vmatprep.subr.mxu0 0.0
        %669 = vmatpush1.msra.mxu0 %v499
        %670 = vmatprep.subr.mxu0 0.0
        %671 = vmatpush1.msra.mxu0 %v500
        %672 = vmatprep.subr.mxu0 0.0
        %673 = vmatpush1.msra.mxu0 %v501
        %674 = vmatprep.subr.mxu0 0.0
        %675 = vmatpush1.msra.mxu0 %v502
        %676 = vmatprep.subr.mxu0 0.0
        %677 = vmatpush1.msra.mxu0 %v503
        %678 = vmatprep.subr.mxu0 0.0
        %679 = vmatpush1.msra.mxu0 %v504
        %680 = vmatprep.subr.mxu0 0.0
        %681 = vmatpush1.msra.mxu0 %v505
        %682 = vmatprep.subr.mxu0 0.0
        %683 = vmatpush1.msra.mxu0 %v506
        %684 = vmatprep.subr.mxu0 0.0
        %685 = vmatpush1.msra.mxu0 0.0
        %686 = vmatprep.subr.mxu0 0.0
        %687 = vmatpush1.msra.mxu0 0.0
        %688 = vmatprep.subr.mxu0 0.0
        %689 = vmatpush1.msra.mxu0 0.0
        %690 = vmatprep.subr.mxu0 0.0
        %691 = vmatpush1.msra.mxu0 0.0
        %692 = vmatprep.subr.mxu0 0.0
        %693 = vmatpush1.msra.mxu0 0.0
        %694 = vmatprep.subr.mxu0 0.0
        %695 = vmatpush1.msra.mxu0 0.0
        %696 = vmatprep.subr.mxu0 0.0
        %697 = vmatpush1.msra.mxu0 0.0
        %698 = vmatprep.subr.mxu0 0.0
        %699 = vmatpush1.msra.mxu0 0.0
        %700 = vmatprep.subr.mxu0 0.0
        %701 = vmatpush1.msra.mxu0 0.0
        %702 = vmatprep.subr.mxu0 0.0
        %703 = vmatpush1.msra.mxu0 0.0
        %704 = vmatprep.subr.mxu0 0.0
        %705 = vmatpush1.msra.mxu0 0.0
        %706 = vmatprep.subr.mxu0 0.0
        %707 = vmatpush1.msra.mxu0 0.0
        %708 = vmatprep.subr.mxu0 0.0
        %709 = vmatpush1.msra.mxu0 0.0
        %710 = vmatprep.subr.mxu0 0.0
        %711 = vmatpush1.msra.mxu0 0.0
        %712 = vmatprep.subr.mxu0 0.0
        %713 = vmatpush1.msra.mxu0 0.0
        %714 = vmatprep.subr.mxu0 0.0
        %715 = vmatpush1.msra.mxu0 0.0
        %716 = vmatprep.subr.mxu0 0.0
        %717 = vmatpush1.msra.mxu0 0.0
        %718 = vmatprep.subr.mxu0 0.0
        %719 = vmatpush1.msra.mxu0 0.0
        %720 = vmatprep.subr.mxu0 0.0
        %721 = vmatpush1.msra.mxu0 0.0
        %722 = vmatprep.subr.mxu0 0.0
        %723 = vmatpush1.msra.mxu0 0.0
        %724 = vmatprep.subr.mxu0 0.0
        %725 = vmatpush1.msra.mxu0 0.0
        %726 = vmatprep.subr.mxu0 0.0
        %727 = vmatpush1.msra.mxu0 0.0
        %728 = vmatprep.subr.mxu0 0.0
        %729 = vmatpush1.msra.mxu0 0.0
        %730 = vmatprep.subr.mxu0 0.0
        %731 = vmatpush1.msra.mxu0 0.0
        %732 = vmatprep.mubr.f32.mxu0 0.0
        %733 = vmatmul.mubr.f32.gmra.mrb[0].mxu0 %v645
        %v734 = vpop.f32.mrb[0].mxu0
        %v735 = vadd.f32 %v606, %v734
        %v736 = vpop.f32.mrb[0].mxu0
        %737 = vmatprep.mubr.f32.mxu0 0.0
        %738 = vmatmul.mubr.f32.gmra.mrb[0].mxu0 %v648
        %v739 = vpop.f32.mrb[0].mxu0
        %v740 = vadd.f32 %v611, %v739
        %v741 = vpop.f32.mrb[0].mxu0
        %742 = vmatprep.mubr.f32.mxu0 0.0
        %743 = vmatmul.mubr.f32.gmra.mrb[0].mxu0 %v651
        %v744 = vpop.f32.mrb[0].mxu0
        %v745 = vadd.f32 %v616, %v744
        %v746 = vpop.f32.mrb[0].mxu0
        %747 = vmatprep.mubr.f32.mxu0 0.0
        %748 = vmatmul.mubr.f32.gmra.mrb[0].mxu0 %v654
        %v749 = vpop.f32.mrb[0].mxu0
        %v750 = vadd.f32 %v621, %v749
        %v751 = vpop.f32.mrb[0].mxu0
        %752 = vmatprep.mubr.f32.mxu0 0.0
        %753 = vmatmul.mubr.f32.gmra.mrb[0].mxu0 %v657
        %v754 = vpop.f32.mrb[0].mxu0
        %v755 = vadd.f32 %v626, %v754
        %v756 = vpop.f32.mrb[0].mxu0
        %757 = vmatprep.mubr.f32.mxu0 0.0
        %758 = vmatmul.mubr.f32.gmra.mrb[0].mxu0 %v660
        %v759 = vpop.f32.mrb[0].mxu0
        %v760 = vadd.f32 %v631, %v759
        %v761 = vpop.f32.mrb[0].mxu0
        %762 = vmatprep.mubr.f32.mxu0 0.0
        %763 = vmatmul.mubr.f32.gmra.mrb[0].mxu0 %v663
        %v764 = vpop.f32.mrb[0].mxu0
        %v765 = vadd.f32 %v636, %v764
        %v766 = vpop.f32.mrb[0].mxu0
        %767 = vmatprep.mubr.f32.mxu0 0.0
        %768 = vmatmul.mubr.f32.gmra.mrb[0].mxu0 %v666
        %v769 = vpop.f32.mrb[0].mxu0
        %v770 = vadd.f32 %v641, %v769
        %v771 = vpop.f32.mrb[0].mxu0
        %772 = vdwg.mxu0
        %v773 = vld [vmem:[%s3] sm:$0x1]
        %v775 = vlaneseq
        %v776 = vshrl.u32 %v775, 7
        %v777 = vsub.s32 0, %v776
        %v778 = vrot.slane %v773, %v777
        %v780 = vadd.f32 %v735, %v778
        %v781 = vadd.f32 %v740, %v778
        %v782 = vadd.f32 %v745, %v778
        %v783 = vadd.f32 %v750, %v778
        %v784 = vadd.f32 %v755, %v778
        %v785 = vadd.f32 %v760, %v778
        %v786 = vadd.f32 %v765, %v778
        %v787 = vadd.f32 %v770, %v778
        %788 = vst.msk [vmem:[%s263] sm:$0xff] %vm282, %v780
        %789 = vst.msk [vmem:[%s263 + $0x8] sm:$0xff] %vm282, %v781
        %790 = vst.msk [vmem:[%s263 + $0x10] sm:$0xff] %vm282, %v782
        %791 = vst.msk [vmem:[%s263 + $0x18] sm:$0xff] %vm282, %v783
        %792 = vst.msk [vmem:[%s263 + $0x20] sm:$0xff] %vm282, %v784
        %793 = vst.msk [vmem:[%s263 + $0x28] sm:$0xff] %vm282, %v785
        %794 = vst.msk [vmem:[%s263 + $0x30] sm:$0xff] %vm282, %v786
        %795 = vst.msk [vmem:[%s263 + $0x38] sm:$0xff] %vm282, %v787
        %s796 = sand.u32 %s135, 1
        %s797 = scalar_lea.sflag [#allocation4], %s796
        %s798 = sand.u32 %s135, 1
        %s799 = smul.addr %s798, 64
        %s800 = scalar_lea.vmem [#allocation8], %s799
        // Predicated region
        $region49: #{tpu_custom_call.1} parent=35 // pred_check
          %p801 = pneg %p145
        $region50: #{tpu_custom_call.1} parent=35 // pred_check_branch
          %803 = sbr.rel (%p801) target = $region52
        $region51: #{tpu_custom_call.1} parent=35 // pred_region
          %s804 = smul.u32 8, %s27
          %s806 = ssub.s32 1024, 1024
          %807 = vsyncadd %s797, %s806
          %s808 = smul.addr %s26, 8
          %s809 = sadd.s32 %s804, %s808
          %s810 = smul.addr %s809, 128
          %s811 = scalar_lea.hbm %s4, %s810
          %s812 = sshll.u32 %s800, 4
          %s813 = int_to_ptr.vmem [resolvable:$true] %s812
          %818 = dma.vmem_to_hbm [thread:$0]  %s813, 1024, %s811, %s797, 128, 128, 8
        $region52: #{tpu_custom_call.1} parent=35 // pred_fallthru
          _
      $region36: #{tpu_custom_call.1} parent=5 // pred_fallthru
        _
      %p819 = scmp.le.s32.totalorder 2, %s17
      // Predicated region
      $region53: #{tpu_custom_call.1} parent=5 // pred_check
        %p820 = pneg %p819
      $region54: #{tpu_custom_call.1} parent=5 // pred_check_branch
        %822 = sbr.rel (%p820) target = $region56
      $region55: #{tpu_custom_call.1} parent=5 // pred_region
        %s823 = ssub.s32 %s17, 2
        // Predicated region
        $region57: #{tpu_custom_call.1} parent=55 // pred_check
          %p824 = pneg %p151
        $region58: #{tpu_custom_call.1} parent=55 // pred_check_branch
          %826 = sbr.rel (%p824) target = $region60
        $region59: #{tpu_custom_call.1} parent=55 // pred_region
          %s827 = sand.u32 %s136, 1
          %s828 = scalar_lea.sflag [#allocation4], %s827
          %s829 = sand.u32 %s136, 1
          %s830 = smul.addr %s829, 64
          %s831 = scalar_lea.vmem [#allocation8], %s830
          %832 = dma.done %s828, 1024
        $region60: #{tpu_custom_call.1} parent=55 // pred_fallthru
          _
      $region56: #{tpu_custom_call.1} parent=5 // pred_fallthru
        _
    $region6: #{tpu_custom_call.1} parent=1 // loop_footer
      %s21 = sadd.s32 1, %s17
    $region7: #{tpu_custom_call.1} parent=1 // loop_footer_branch
      %16 = sbr.rel target = $region3
    $region8: #{tpu_custom_call.1} parent=1 // loop_exit
      _
    %833 = vsyncpa [#allocation3], 1
    %s834 = scalar_lea.sflag [#allocation3], 1
    %835 = vsyncpa %s834, 1
    %836 = vsyncpa [#allocation6], 1
    %837 = vsyncpa [#allocation4], 1
    %s838 = scalar_lea.sflag [#allocation4], 1
    %839 = vsyncpa %s838, 1

</llo_original>
